<compile_context>
chip_gen: v6e
topology: v6e:2x2x1
jax: 0.10.0
libtpu: 0.0.40
codegen_flags: <defaults>
</compile_context>

<pallas_src>
import jax
import jax.numpy as jnp
from jax.experimental import pallas as pl
from jax.experimental.pallas import tpu as pltpu


def _round_up(a, b):
    return (a + b - 1) // b * b


def _gelu_exact(x):
    # torch.nn.GELU default is the exact (erf-based) GELU; keep its numerics.
    return 0.5 * x * (1.0 + jax.lax.erf(x * 0.7071067811865476))


def mlp_kernel(x_ref, w1_ref, b1_ref, w2_ref, b2_ref, o_ref, acc_ref):
    # x_ref : (tm, Dp)   bf16 token tile (resident across the hidden axis)
    # w1_ref: (Dp, th)   bf16 fc1 weight slice
    # b1_ref: (1, th)    f32 fc1 bias slice
    # w2_ref: (th, Op)   bf16 fc2 weight slice
    # b2_ref: (1, Op)    f32 fc2 bias
    # o_ref : (tm, Op)   output tile (written on last hidden step)
    # acc_ref: (tm, Op)  f32 accumulator scratch
    k = pl.program_id(1)

    @pl.when(k == 0)
    def _init():
        acc_ref[...] = jnp.zeros_like(acc_ref)

    # fc1 for this hidden slice (full D per step, so GELU is exact per slice).
    h = jnp.dot(x_ref[...], w1_ref[...], preferred_element_type=jnp.float32)
    h = _gelu_exact(h + b1_ref[...])

    # fc2 partial-sum over the hidden axis.
    acc_ref[...] += jnp.dot(h.astype(w2_ref.dtype), w2_ref[...],
                            preferred_element_type=jnp.float32)

    @pl.when(k == pl.num_programs(1) - 1)
    def _finalize():
        o_ref[...] = (acc_ref[...] + b2_ref[...]).astype(o_ref.dtype)


def mlp_pallas(x, w1, b1, w2, b2, *, tm=256, th=512, compute_dtype=jnp.bfloat16):
    """x: (B, N, D). w1: (D, H), b1: (H,), w2: (H, O), b2: (O,).

    Weights are stored (in_features, out_features), i.e. transposed relative
    to torch.nn.Linear's (out, in) convention.
    """
    B, N, D = x.shape
    H = w1.shape[1]
    O = w2.shape[1]
    M = B * N
    out_dtype = x.dtype

    # ---- padded / tiled sizes (lane = 128, sublane = 8) ----
    Dp = _round_up(D, 128)
    Op = _round_up(O, 128)

    tm_eff = min(_round_up(tm, 8), _round_up(M, 8))
    Mp = _round_up(M, tm_eff)

    th_eff = min(_round_up(th, 128), _round_up(H, 128))
    Hp = _round_up(H, th_eff)

    # ---- pad + cast (zero padding is exact for this MLP) ----
    x2 = jnp.pad(x.reshape(M, D), ((0, Mp - M), (0, Dp - D))).astype(compute_dtype)
    w1p = jnp.pad(w1, ((0, Dp - D), (0, Hp - H))).astype(compute_dtype)
    w2p = jnp.pad(w2, ((0, Hp - H), (0, Op - O))).astype(compute_dtype)
    b1p = jnp.pad(b1, (0, Hp - H)).astype(jnp.float32).reshape(1, Hp)
    b2p = jnp.pad(b2, (0, Op - O)).astype(jnp.float32).reshape(1, Op)

    grid = (Mp // tm_eff, Hp // th_eff)

    # ---- VMEM budget (keep explicit so v7x's 64 MiB is respected) ----
    cbytes = jnp.dtype(compute_dtype).itemsize
    obytes = jnp.dtype(out_dtype).itemsize
    vmem_bytes = (
        2 * tm_eff * Dp * cbytes          # x tiles (double-buffered)
        + 2 * Dp * th_eff * cbytes        # w1 tiles
        + 2 * th_eff * Op * cbytes        # w2 tiles
        + 2 * 8 * th_eff * 4              # b1 tiles (sublane-padded)
        + 2 * 8 * Op * 4                  # b2 tiles
        + 2 * tm_eff * Op * obytes        # output tiles
        + tm_eff * Op * 4                 # f32 accumulator scratch
        + tm_eff * th_eff * 4             # fc1 intermediate
    )
    vmem_limit = int(min(max(2 * vmem_bytes, 32 * 1024 * 1024),
                         48 * 1024 * 1024))

    cost = pl.CostEstimate(
        flops=2 * M * (D * H + H * O),
        transcendentals=M * H,
        bytes_accessed=(x2.size * cbytes + w1p.size * cbytes + w2p.size * cbytes
                        + b1p.size * 4 + b2p.size * 4 + Mp * Op * obytes),
    )

    out2 = pl.pallas_call(
        mlp_kernel,
        out_shape=jax.ShapeDtypeStruct((Mp, Op), out_dtype),
        grid_spec=pltpu.PrefetchScalarGridSpec(
            num_scalar_prefetch=0,
            grid=grid,
            in_specs=[
                pl.BlockSpec((tm_eff, Dp), lambda i, k: (i, 0)),   # x tile (kept across k)
                pl.BlockSpec((Dp, th_eff), lambda i, k: (0, k)),   # w1 hidden slice
                pl.BlockSpec((1, th_eff), lambda i, k: (0, k)),    # b1 hidden slice
                pl.BlockSpec((th_eff, Op), lambda i, k: (k, 0)),   # w2 hidden slice
                pl.BlockSpec((1, Op), lambda i, k: (0, 0)),        # b2
            ],
            out_specs=pl.BlockSpec((tm_eff, Op), lambda i, k: (i, 0)),
            scratch_shapes=[pltpu.VMEM((tm_eff, Op), jnp.float32)],
        ),
        compiler_params=pltpu.CompilerParams(
            dimension_semantics=("parallel", "arbitrary"),
            vmem_limit_bytes=vmem_limit,
        ),
        cost_estimate=cost,
    )(x2, w1p, b1p, w2p, b2p)

    return out2[:M, :O].reshape(B, N, O)


def mlp_reference(x, w1, b1, w2, b2):
    h = jnp.einsum("bnd,dh->bnh", x, w1) + b1
    h = _gelu_exact(h)
    return jnp.einsum("bnh,ho->bno", h, w2) + b2


def _make_inputs(key, B, N, D, H, O):
    kx, k1, k2, k3, k4 = jax.random.split(key, 5)
    x = jax.random.normal(kx, (B, N, D), dtype=jnp.float32)
    w1 = jax.random.normal(k1, (D, H), dtype=jnp.float32) * 0.02
    b1 = jax.random.normal(k2, (H,), dtype=jnp.float32) * 0.02
    w2 = jax.random.normal(k3, (H, O), dtype=jnp.float32) * 0.02
    b2 = jax.random.normal(k4, (O,), dtype=jnp.float32) * 0.02
    return x, w1, b1, w2, b2


if __name__ == "__main__":
    key = jax.random.PRNGKey(0)
    k_a, k_b = jax.random.split(key)

    # Test 1: small ViT-ish shapes with a token count that is NOT a multiple
    # of 8 (exercises the M-padding path): batch=2, seq=10, D=32, hidden=64.
    B, N, D, H = 2, 10, 32, 64
    O = D
    x, w1, b1, w2, b2 = _make_inputs(k_a, B, N, D, H, O)
    out = jax.block_until_ready(mlp_pallas(x, w1, b1, w2, b2))
    ref = mlp_reference(x, w1, b1, w2, b2)
    assert out.shape == (B, N, O)
    # bf16 compute vs f32 reference -> looser tolerance than the f32-only version.
    assert jnp.allclose(out, ref, atol=2e-2, rtol=2e-2), "mismatch vs reference (test 1)"

    # Test 2: exercise the multi-step hidden-axis accumulator (H tiled twice).
    B, N, D, H = 2, 8, 128, 256
    O = D
    x, w1, b1, w2, b2 = _make_inputs(k_b, B, N, D, H, O)
    out = jax.block_until_ready(mlp_pallas(x, w1, b1, w2, b2, th=128))
    ref = mlp_reference(x, w1, b1, w2, b2)
    assert out.shape == (B, N, O)
    assert jnp.allclose(out, ref, atol=2e-2, rtol=2e-2), "mismatch vs reference (test 2)"

    print("KERNEL_OK")
</pallas_src>

<mosaic_0001>
module attributes {stable_mosaic.version = 11 : i64} {
  func.func @mlp_kernel(%arg0: i32, %arg1: i32, %arg2: memref<24x128xbf16, #tpu.memory_space<vmem>>, %arg3: memref<128x128xbf16, #tpu.memory_space<vmem>>, %arg4: memref<1x128xf32, #tpu.memory_space<vmem>>, %arg5: memref<128x128xbf16, #tpu.memory_space<vmem>>, %arg6: memref<1x128xf32, #tpu.memory_space<vmem>>, %arg7: memref<24x128xf32, #tpu.memory_space<vmem>>, %arg8: memref<24x128xf32, #tpu.memory_space<vmem>>) attributes {dimension_semantics = [#tpu.dimension_semantics<parallel>, #tpu.dimension_semantics<arbitrary>], iteration_bounds = array<i64: 1, 1>, scalar_prefetch = 0 : i64, scratch_operands = 1 : i64, tpu.core_type = #tpu.core_type<tc>, window_params = [{transform_indices = @transform_0, window_bounds = array<i64: 24, 128>}, {transform_indices = @transform_1, window_bounds = array<i64: 128, 128>}, {transform_indices = @transform_2, window_bounds = array<i64: 1, 128>}, {transform_indices = @transform_3, window_bounds = array<i64: 128, 128>}, {pipeline_mode = #tpu.pipeline_mode<synchronous>, transform_indices = @transform_4, window_bounds = array<i64: 1, 128>}, {transform_indices = @transform_5, window_bounds = array<i64: 24, 128>}]} {
    %c0_i32 = arith.constant 0 : i32
    %0 = arith.cmpi eq, %arg1, %c0_i32 : i32
    %1 = arith.extui %0 : i1 to i32
    %c0_i32_0 = arith.constant 0 : i32
    %2 = arith.cmpi ne, %1, %c0_i32_0 : i32
    scf.if %2 {
      %cst_18 = arith.constant 0.000000e+00 : f32
      %26 = vector.broadcast %cst_18 : f32 to vector<24x128xf32>
      %c0_19 = arith.constant 0 : index
      %c0_20 = arith.constant 0 : index
      %27 = vector.load %arg8[%c0_19, %c0_20] : memref<24x128xf32, #tpu.memory_space<vmem>>, vector<24x128xf32>
      tpu.vector_store %arg8[%c0_19, %c0_20], %26 {strides = array<i32>} : memref<24x128xf32, #tpu.memory_space<vmem>>, vector<24x128xf32>,
    } else {
    }
    %c0 = arith.constant 0 : index
    %c0_1 = arith.constant 0 : index
    %3 = vector.load %arg2[%c0, %c0_1] : memref<24x128xbf16, #tpu.memory_space<vmem>>, vector<24x128xbf16>
    %c0_2 = arith.constant 0 : index
    %c0_3 = arith.constant 0 : index
    %4 = vector.load %arg3[%c0_2, %c0_3] : memref<128x128xbf16, #tpu.memory_space<vmem>>, vector<128x128xbf16>
    %cst = arith.constant dense<0.000000e+00> : vector<24x128xf32>
    %5 = tpu.matmul %3, %4, %cst {dimension_numbers = #tpu.dot_dimension_numbers<[1], [0], [0], [1], [0, 0, 1, 1], [], []>} : vector<24x128xbf16>, vector<128x128xbf16>, vector<24x128xf32> -> vector<24x128xf32>
    %c0_4 = arith.constant 0 : index
    %c0_5 = arith.constant 0 : index
    %6 = vector.load %arg4[%c0_4, %c0_5] : memref<1x128xf32, #tpu.memory_space<vmem>>, vector<1x128xf32>
    %7 = vector.broadcast %6 : vector<1x128xf32> to vector<24x128xf32>
    %8 = arith.addf %5, %7 : vector<24x128xf32>
    %cst_6 = arith.constant 5.000000e-01 : f32
    %9 = vector.broadcast %cst_6 : f32 to vector<24x128xf32>
    %10 = arith.mulf %9, %8 : vector<24x128xf32>
    %cst_7 = arith.constant 0.707106769 : f32
    %11 = vector.broadcast %cst_7 : f32 to vector<24x128xf32>
    %12 = arith.mulf %8, %11 : vector<24x128xf32>
    %13 = math.erf %12 : vector<24x128xf32>
    %cst_8 = arith.constant 1.000000e+00 : f32
    %14 = vector.broadcast %cst_8 : f32 to vector<24x128xf32>
    %15 = arith.addf %14, %13 : vector<24x128xf32>
    %16 = arith.mulf %10, %15 : vector<24x128xf32>
    %c0_9 = arith.constant 0 : index
    %c0_10 = arith.constant 0 : index
    %17 = vector.load %arg8[%c0_9, %c0_10] : memref<24x128xf32, #tpu.memory_space<vmem>>, vector<24x128xf32>
    %18 = arith.truncf %16 : vector<24x128xf32> to vector<24x128xbf16>
    %c0_11 = arith.constant 0 : index
    %c0_12 = arith.constant 0 : index
    %19 = vector.load %arg5[%c0_11, %c0_12] : memref<128x128xbf16, #tpu.memory_space<vmem>>, vector<128x128xbf16>
    %cst_13 = arith.constant dense<0.000000e+00> : vector<24x128xf32>
    %20 = tpu.matmul %18, %19, %cst_13 {dimension_numbers = #tpu.dot_dimension_numbers<[1], [0], [0], [1], [0, 0, 1, 1], [], []>} : vector<24x128xbf16>, vector<128x128xbf16>, vector<24x128xf32> -> vector<24x128xf32>
    %21 = arith.addf %17, %20 : vector<24x128xf32>
    %c0_14 = arith.constant 0 : index
    %c0_15 = arith.constant 0 : index
    %22 = vector.load %arg8[%c0_14, %c0_15] : memref<24x128xf32, #tpu.memory_space<vmem>>, vector<24x128xf32>
    tpu.vector_store %arg8[%c0_14, %c0_15], %21 {strides = array<i32>} : memref<24x128xf32, #tpu.memory_space<vmem>>, vector<24x128xf32>,
    %c0_i32_16 = arith.constant 0 : i32
    %23 = arith.cmpi eq, %arg1, %c0_i32_16 : i32
    %24 = arith.extui %23 : i1 to i32
    %c0_i32_17 = arith.constant 0 : i32
    %25 = arith.cmpi ne, %24, %c0_i32_17 : i32
    scf.if %25 {
      %c0_18 = arith.constant 0 : index
      %c0_19 = arith.constant 0 : index
      %26 = vector.load %arg8[%c0_18, %c0_19] : memref<24x128xf32, #tpu.memory_space<vmem>>, vector<24x128xf32>
      %c0_20 = arith.constant 0 : index
      %c0_21 = arith.constant 0 : index
      %27 = vector.load %arg6[%c0_20, %c0_21] : memref<1x128xf32, #tpu.memory_space<vmem>>, vector<1x128xf32>
      %28 = vector.broadcast %27 : vector<1x128xf32> to vector<24x128xf32>
      %29 = arith.addf %26, %28 : vector<24x128xf32>
      %c0_22 = arith.constant 0 : index
      %c0_23 = arith.constant 0 : index
      %30 = vector.load %arg7[%c0_22, %c0_23] : memref<24x128xf32, #tpu.memory_space<vmem>>, vector<24x128xf32>
      tpu.vector_store %arg7[%c0_22, %c0_23], %29 {strides = array<i32>} : memref<24x128xf32, #tpu.memory_space<vmem>>, vector<24x128xf32>,
    } else {
    }
    return
  }
  func.func @transform_0(%arg0: i32, %arg1: i32) -> (i32, i32) {
    %c0_i32 = arith.constant 0 : i32
    %c0_i32_0 = arith.constant 0 : i32
    return %arg0, %c0_i32 : i32, i32
  }
  func.func @transform_1(%arg0: i32, %arg1: i32) -> (i32, i32) {
    %c0_i32 = arith.constant 0 : i32
    %c0_i32_0 = arith.constant 0 : i32
    return %c0_i32, %arg1 : i32, i32
  }
  func.func @transform_2(%arg0: i32, %arg1: i32) -> (i32, i32) {
    %c0_i32 = arith.constant 0 : i32
    %c0_i32_0 = arith.constant 0 : i32
    return %c0_i32, %arg1 : i32, i32
  }
  func.func @transform_3(%arg0: i32, %arg1: i32) -> (i32, i32) {
    %c0_i32 = arith.constant 0 : i32
    %c0_i32_0 = arith.constant 0 : i32
    return %arg1, %c0_i32 : i32, i32
  }
  func.func @transform_4(%arg0: i32, %arg1: i32) -> (i32, i32) {
    %c0_i32 = arith.constant 0 : i32
    %c0_i32_0 = arith.constant 0 : i32
    %c0_i32_1 = arith.constant 0 : i32
    return %c0_i32, %c0_i32_0 : i32, i32
  }
  func.func @transform_5(%arg0: i32, %arg1: i32) -> (i32, i32) {
    %c0_i32 = arith.constant 0 : i32
    %c0_i32_0 = arith.constant 0 : i32
    return %arg0, %c0_i32 : i32, i32
  }
}

</mosaic_0001>

<llo_original>
// kernel: tpu_custom_call.1
$region0: #{tpu_custom_call.1}
  #allocation0 [shape = 'u32[]', space=smem, size = 0x4, offset = 0x4, fixed_abs, tag = 'smem constant byte address 0x4 - core index']
  #allocation1 [shape = 'u32[144,128]{1,0:T(1,128)}', space=vmem, size = 0x12000, scoped, tag = 'internal scratch']
  #allocation2 [shape = 'f32[24,128]{1,0:T(8,128)}', space=vmem, size = 0x3000, scoped, tag = 'scratch operand']
  %s0 = inlined_call_operand.hbm [shape: bf16[24,128], index: 0, kind: input, shape index: {}]
  %s1 = inlined_call_operand.hbm [shape: bf16[128,128], index: 1, kind: input, shape index: {}]
  %s2 = inlined_call_operand.vmem [shape: f32[1,128], index: 2, kind: input, shape index: {}]
  %s3 = inlined_call_operand.hbm [shape: bf16[128,128], index: 3, kind: input, shape index: {}]
  %s4 = inlined_call_operand.vmem [shape: f32[1,128], index: 4, kind: input, shape index: {}]
  %s5 = inlined_call_operand.hbm [shape: f32[24,128], index: 5, kind: output, shape index: {}]
  %s6 = sld [smem:[#allocation0]]
  $region50: #{tpu_custom_call.1} parent=0
    _
  %s8 = ssub.s32 1, %s6
  %s9 = scalar_select 0, %s8, %s6
  $region1: #{tpu_custom_call.1} parent=0
    #allocation3 [shape = 'u8[6144]{0}', space=vmem, size = 0x1800, scoped, tag = 'input window, operand 0, single buffered']
    #allocation4 [shape = 's32[1]{0}', space=sflag, size = 0x4, scoped, tag = 'scoped memory for tpu_custom_call.1']
    #allocation5 [shape = 's32[1]{0}', space=sflag, size = 0x4, scoped, tag = 'scoped memory for tpu_custom_call.1']
    #allocation6 [shape = 'u8[32768]{0}', space=vmem, size = 0x8000, scoped, tag = 'input window, operand 1, single buffered']
    #allocation7 [shape = 's32[1]{0}', space=sflag, size = 0x4, scoped, tag = 'scoped memory for tpu_custom_call.1']
    #allocation8 [shape = 'u8[32768]{0}', space=vmem, size = 0x8000, scoped, tag = 'input window, operand 3, single buffered']
    #allocation9 [shape = 'u8[12288]{0}', space=vmem, size = 0x3000, scoped, tag = 'output window, operand 0, single buffered']
    %10 = vsyncpa [#allocation4], 0
    %11 = vsyncpa [#allocation7], 0
    %12 = vsyncpa [#allocation5], 0
    // Predicated region
    $region2: #{tpu_custom_call.1} parent=1 // pred_check
      _
    $region3: #{tpu_custom_call.1} parent=1 // pred_check_branch
      %14 = sbr.rel (0) target = $region5
    $region4: #{tpu_custom_call.1} parent=1 // pred_region
      %s16 = ssub.s32 192, 192
      %17 = vsyncadd [#allocation4], %s16
      %s18 = sshll.u32 [#allocation3], 4
      %s19 = int_to_ptr.vmem [resolvable:$true] %s18
      %24 = dma.hbm_to_vmem [thread:$0]  %s0, 192, %s19, [#allocation4], 64, 64, 4
    $region5: #{tpu_custom_call.1} parent=1 // pred_fallthru
      _
    // Predicated region
    $region6: #{tpu_custom_call.1} parent=1 // pred_check
      _
    $region7: #{tpu_custom_call.1} parent=1 // pred_check_branch
      %26 = sbr.rel (0) target = $region9
    $region8: #{tpu_custom_call.1} parent=1 // pred_region
      %s28 = ssub.s32 1024, 1024
      %29 = vsyncadd [#allocation7], %s28
      %s30 = sshll.u32 [#allocation6], 4
      %s31 = int_to_ptr.vmem [resolvable:$true] %s30
      %36 = dma.hbm_to_vmem [thread:$0]  %s1, 1024, %s31, [#allocation7], 64, 64, 4
    $region9: #{tpu_custom_call.1} parent=1 // pred_fallthru
      _
    // Predicated region
    $region10: #{tpu_custom_call.1} parent=1 // pred_check
      _
    $region11: #{tpu_custom_call.1} parent=1 // pred_check_branch
      %38 = sbr.rel (0) target = $region13
    $region12: #{tpu_custom_call.1} parent=1 // pred_region
      _
    $region13: #{tpu_custom_call.1} parent=1 // pred_fallthru
      _
    // Predicated region
    $region14: #{tpu_custom_call.1} parent=1 // pred_check
      _
    $region15: #{tpu_custom_call.1} parent=1 // pred_check_branch
      %40 = sbr.rel (0) target = $region17
    $region16: #{tpu_custom_call.1} parent=1 // pred_region
      %s42 = ssub.s32 1024, 1024
      %43 = vsyncadd [#allocation7], %s42
      %s44 = sshll.u32 [#allocation8], 4
      %s45 = int_to_ptr.vmem [resolvable:$true] %s44
      %50 = dma.hbm_to_vmem [thread:$0]  %s3, 1024, %s45, [#allocation7], 64, 64, 4
    $region17: #{tpu_custom_call.1} parent=1 // pred_fallthru
      _
    // Predicated region
    $region18: #{tpu_custom_call.1} parent=1 // pred_check
      _
    $region19: #{tpu_custom_call.1} parent=1 // pred_check_branch
      %52 = sbr.rel (0) target = $region21
    $region20: #{tpu_custom_call.1} parent=1 // pred_region
      _
    $region21: #{tpu_custom_call.1} parent=1 // pred_fallthru
      _
    // Predicated region
    $region22: #{tpu_custom_call.1} parent=1 // pred_check
      _
    $region23: #{tpu_custom_call.1} parent=1 // pred_check_branch
      %54 = sbr.rel (0) target = $region25
    $region24: #{tpu_custom_call.1} parent=1 // pred_region
      %55 = dma.done [#allocation4], 192
    $region25: #{tpu_custom_call.1} parent=1 // pred_fallthru
      _
    // Predicated region
    $region26: #{tpu_custom_call.1} parent=1 // pred_check
      _
    $region27: #{tpu_custom_call.1} parent=1 // pred_check_branch
      %57 = sbr.rel (0) target = $region29
    $region28: #{tpu_custom_call.1} parent=1 // pred_region
      %58 = dma.done [#allocation7], 1024
    $region29: #{tpu_custom_call.1} parent=1 // pred_fallthru
      _
    // Predicated region
    $region30: #{tpu_custom_call.1} parent=1 // pred_check
      _
    $region31: #{tpu_custom_call.1} parent=1 // pred_check_branch
      %60 = sbr.rel (0) target = $region33
    $region32: #{tpu_custom_call.1} parent=1 // pred_region
      %61 = dma.done [#allocation7], 1024
    $region33: #{tpu_custom_call.1} parent=1 // pred_fallthru
      _
    %p63 = scmp.eq.s32.totalorder 0, 0
    // Predicated region
    $region34: #{tpu_custom_call.1} parent=1 // pred_check
      %p64 = pneg %p63
    $region35: #{tpu_custom_call.1} parent=1 // pred_check_branch
      %66 = sbr.rel (%p64) target = $region37
    $region36: #{tpu_custom_call.1} parent=1 // pred_region
      %67 = vst [vmem:[#allocation2] sm:$0xff] 0.0
      %68 = vst [vmem:[#allocation2 + $0x8] sm:$0xff] 0.0
      %69 = vst [vmem:[#allocation2 + $0x10] sm:$0xff] 0.0
    $region37: #{tpu_custom_call.1} parent=1 // pred_fallthru
      _
    %v70 = vld [vmem:[#allocation3] sm:$0xf]
    %v71 = vld [vmem:[#allocation3 + $0x4] sm:$0xf]
    %v72 = vld [vmem:[#allocation3 + $0x8] sm:$0xf]
    %v73 = vld [vmem:[#allocation6] sm:$0xf]
    %v74 = vld [vmem:[#allocation6 + $0x4] sm:$0xf]
    %v75 = vld [vmem:[#allocation6 + $0x8] sm:$0xf]
    %v76 = vld [vmem:[#allocation6 + $0xc] sm:$0xf]
    %v77 = vld [vmem:[#allocation6 + $0x10] sm:$0xf]
    %v78 = vld [vmem:[#allocation6 + $0x14] sm:$0xf]
    %v79 = vld [vmem:[#allocation6 + $0x18] sm:$0xf]
    %v80 = vld [vmem:[#allocation6 + $0x1c] sm:$0xf]
    %v81 = vld [vmem:[#allocation6 + $0x20] sm:$0xf]
    %v82 = vld [vmem:[#allocation6 + $0x24] sm:$0xf]
    %v83 = vld [vmem:[#allocation6 + $0x28] sm:$0xf]
    %v84 = vld [vmem:[#allocation6 + $0x2c] sm:$0xf]
    %v85 = vld [vmem:[#allocation6 + $0x30] sm:$0xf]
    %v86 = vld [vmem:[#allocation6 + $0x34] sm:$0xf]
    %v87 = vld [vmem:[#allocation6 + $0x38] sm:$0xf]
    %v88 = vld [vmem:[#allocation6 + $0x3c] sm:$0xf]
    %v89 = vld [vmem:[%s2] sm:$0x1]
    %v91 = vlaneseq
    %v92 = vshrl.u32 %v91, 7
    %v93 = vsub.s32 0, %v92
    %v94 = vrot.slane %v89, %v93
    %v99 = vunpack.c.l.b16 %v70
    %v100 = vunpack.c.l.b16 %v71
    %v101 = vunpack.c.l.b16 %v72
    %v102 = vpack.c.b16 %v100, %v99
    %v103 = vpack.c.b16 %v101, %v101
    %v122 = vunpack.c.l.b16 %v73
    %v123 = vunpack.c.l.b16 %v74
    %v124 = vunpack.c.l.b16 %v75
    %v125 = vunpack.c.l.b16 %v76
    %v126 = vunpack.c.l.b16 %v77
    %v127 = vunpack.c.l.b16 %v78
    %v128 = vunpack.c.l.b16 %v79
    %v129 = vunpack.c.l.b16 %v80
    %v130 = vunpack.c.l.b16 %v81
    %v131 = vunpack.c.l.b16 %v82
    %v132 = vunpack.c.l.b16 %v83
    %v133 = vunpack.c.l.b16 %v84
    %v134 = vunpack.c.l.b16 %v85
    %v135 = vunpack.c.l.b16 %v86
    %v136 = vunpack.c.l.b16 %v87
    %v137 = vunpack.c.l.b16 %v88
    %v138 = vpack.c.b16 %v123, %v122
    %v139 = vpack.c.b16 %v125, %v124
    %v140 = vpack.c.b16 %v127, %v126
    %v141 = vpack.c.b16 %v129, %v128
    %v142 = vpack.c.b16 %v131, %v130
    %v143 = vpack.c.b16 %v133, %v132
    %v144 = vpack.c.b16 %v135, %v134
    %v145 = vpack.c.b16 %v137, %v136
    %154 = vmatprep.subr.bf16.mxu0 0
    %155 = vmatpush1.bf16.msra.mxu0 %v145
    %156 = vmatprep.subr.bf16.mxu0 0
    %157 = vmatpush1.bf16.msra.mxu0 %v144
    %158 = vmatprep.subr.bf16.mxu0 0
    %159 = vmatpush1.bf16.msra.mxu0 %v143
    %160 = vmatprep.subr.bf16.mxu0 0
    %161 = vmatpush1.bf16.msra.mxu0 %v142
    %162 = vmatprep.subr.bf16.mxu0 0
    %163 = vmatpush1.bf16.msra.mxu0 %v141
    %164 = vmatprep.subr.bf16.mxu0 0
    %165 = vmatpush1.bf16.msra.mxu0 %v140
    %166 = vmatprep.subr.bf16.mxu0 0
    %167 = vmatpush1.bf16.msra.mxu0 %v139
    %168 = vmatprep.subr.bf16.mxu0 0
    %169 = vmatpush1.bf16.msra.mxu0 %v138
    %170 = vmatprep.subr.bf16.mxu0 0
    %171 = vmatpush2.bf16.msra.mxu0 0
    %172 = vmatprep.subr.bf16.mxu0 0
    %173 = vmatpush2.bf16.msra.mxu0 0
    %174 = vmatprep.subr.bf16.mxu0 0
    %175 = vmatpush2.bf16.msra.mxu0 0
    %176 = vmatprep.subr.bf16.mxu0 0
    %177 = vmatpush2.bf16.msra.mxu0 0
    %178 = vmatprep.subr.bf16.mxu0 0
    %179 = vmatpush2.bf16.msra.mxu0 0
    %180 = vmatprep.subr.bf16.mxu0 0
    %181 = vmatpush2.bf16.msra.mxu0 0
    %182 = vmatprep.subr.bf16.mxu0 0
    %183 = vmatpush2.bf16.msra.mxu0 0
    %184 = vmatprep.subr.bf16.mxu0 0
    %185 = vmatpush2.bf16.msra.mxu0 0
    %186 = vmatprep.mubr.bf16.mxu0 0
    %187 = vmatmul.mubr.bf16.gmra.mxu0 %v102
    %v188 = vpop.f32.mrf.mxu0
    %v189 = vadd.f32 %v94, %v188
    %v190 = vpop.f32.mrf.mxu0
    %v191 = vpop.f32.mrf.mxu0
    %v192 = vadd.f32 %v94, %v191
    %v193 = vpop.f32.mrf.mxu0
    %194 = vmatprep.mubr.bf16.mxu0 0
    %195 = vmatmul.mubr.bf16.gmra.mxu0 %v103
    %v196 = vpop.f32.mrf.mxu0
    %v197 = vadd.f32 %v94, %v196
    %v198 = vpop.f32.mrf.mxu0
    %v199 = vpop.f32.mrf.mxu0
    %v200 = vpop.f32.mrf.mxu0
    %201 = vdwg.mxu0
    %v202 = vmul.f32 %v189, 0.5
    %v203 = vmul.f32 %v192, 0.5
    %v204 = vmul.f32 %v197, 0.5
    %v205 = vmul.f32 %v189, 0.70710677
    %v206 = vmul.f32 %v192, 0.70710677
    %v207 = vmul.f32 %v197, 0.70710677
    %v208 = verf.f32.pop %v205
    %v209 = verf.f32.pop %v206
    %v210 = verf.f32.pop %v207
    %v211 = vadd.f32 %v208, 1.0
    %v212 = vadd.f32 %v209, 1.0
    %v213 = vadd.f32 %v210, 1.0
    %v214 = vmul.f32 %v202, %v211
    %v215 = vmul.f32 %v203, %v212
    %v216 = vmul.f32 %v204, %v213
    %v217 = vld [vmem:[#allocation2] sm:$0xff]
    %v218 = vld [vmem:[#allocation2 + $0x8] sm:$0xff]
    %v219 = vld [vmem:[#allocation2 + $0x10] sm:$0xff]
    %v220 = vpack.c.bf16 %v215, %v214
    %v221 = vpack.c.bf16 %v216, %v216
    %v222 = vld [vmem:[#allocation8] sm:$0xf]
    %v223 = vld [vmem:[#allocation8 + $0x4] sm:$0xf]
    %v224 = vld [vmem:[#allocation8 + $0x8] sm:$0xf]
    %v225 = vld [vmem:[#allocation8 + $0xc] sm:$0xf]
    %v226 = vld [vmem:[#allocation8 + $0x10] sm:$0xf]
    %v227 = vld [vmem:[#allocation8 + $0x14] sm:$0xf]
    %v228 = vld [vmem:[#allocation8 + $0x18] sm:$0xf]
    %v229 = vld [vmem:[#allocation8 + $0x1c] sm:$0xf]
    %v230 = vld [vmem:[#allocation8 + $0x20] sm:$0xf]
    %v231 = vld [vmem:[#allocation8 + $0x24] sm:$0xf]
    %v232 = vld [vmem:[#allocation8 + $0x28] sm:$0xf]
    %v233 = vld [vmem:[#allocation8 + $0x2c] sm:$0xf]
    %v234 = vld [vmem:[#allocation8 + $0x30] sm:$0xf]
    %v235 = vld [vmem:[#allocation8 + $0x34] sm:$0xf]
    %v236 = vld [vmem:[#allocation8 + $0x38] sm:$0xf]
    %v237 = vld [vmem:[#allocation8 + $0x3c] sm:$0xf]
    %v254 = vunpack.c.l.b16 %v222
    %v255 = vunpack.c.l.b16 %v223
    %v256 = vunpack.c.l.b16 %v224
    %v257 = vunpack.c.l.b16 %v225
    %v258 = vunpack.c.l.b16 %v226
    %v259 = vunpack.c.l.b16 %v227
    %v260 = vunpack.c.l.b16 %v228
    %v261 = vunpack.c.l.b16 %v229
    %v262 = vunpack.c.l.b16 %v230
    %v263 = vunpack.c.l.b16 %v231
    %v264 = vunpack.c.l.b16 %v232
    %v265 = vunpack.c.l.b16 %v233
    %v266 = vunpack.c.l.b16 %v234
    %v267 = vunpack.c.l.b16 %v235
    %v268 = vunpack.c.l.b16 %v236
    %v269 = vunpack.c.l.b16 %v237
    %v270 = vpack.c.b16 %v255, %v254
    %v271 = vpack.c.b16 %v257, %v256
    %v272 = vpack.c.b16 %v259, %v258
    %v273 = vpack.c.b16 %v261, %v260
    %v274 = vpack.c.b16 %v263, %v262
    %v275 = vpack.c.b16 %v265, %v264
    %v276 = vpack.c.b16 %v267, %v266
    %v277 = vpack.c.b16 %v269, %v268
    %286 = vmatprep.subr.bf16.mxu0 0
    %287 = vmatpush1.bf16.msra.mxu0 %v277
    %288 = vmatprep.subr.bf16.mxu0 0
    %289 = vmatpush1.bf16.msra.mxu0 %v276
    %290 = vmatprep.subr.bf16.mxu0 0
    %291 = vmatpush1.bf16.msra.mxu0 %v275
    %292 = vmatprep.subr.bf16.mxu0 0
    %293 = vmatpush1.bf16.msra.mxu0 %v274
    %294 = vmatprep.subr.bf16.mxu0 0
    %295 = vmatpush1.bf16.msra.mxu0 %v273
    %296 = vmatprep.subr.bf16.mxu0 0
    %297 = vmatpush1.bf16.msra.mxu0 %v272
    %298 = vmatprep.subr.bf16.mxu0 0
    %299 = vmatpush1.bf16.msra.mxu0 %v271
    %300 = vmatprep.subr.bf16.mxu0 0
    %301 = vmatpush1.bf16.msra.mxu0 %v270
    %302 = vmatprep.subr.bf16.mxu0 0
    %303 = vmatpush2.bf16.msra.mxu0 0
    %304 = vmatprep.subr.bf16.mxu0 0
    %305 = vmatpush2.bf16.msra.mxu0 0
    %306 = vmatprep.subr.bf16.mxu0 0
    %307 = vmatpush2.bf16.msra.mxu0 0
    %308 = vmatprep.subr.bf16.mxu0 0
    %309 = vmatpush2.bf16.msra.mxu0 0
    %310 = vmatprep.subr.bf16.mxu0 0
    %311 = vmatpush2.bf16.msra.mxu0 0
    %312 = vmatprep.subr.bf16.mxu0 0
    %313 = vmatpush2.bf16.msra.mxu0 0
    %314 = vmatprep.subr.bf16.mxu0 0
    %315 = vmatpush2.bf16.msra.mxu0 0
    %316 = vmatprep.subr.bf16.mxu0 0
    %317 = vmatpush2.bf16.msra.mxu0 0
    %318 = vmatprep.mubr.bf16.mxu0 0
    %319 = vmatmul.mubr.bf16.gmra.mxu0 %v220
    %v320 = vpop.f32.mrf.mxu0
    %v321 = vadd.f32 0.0, %v320
    %v322 = vpop.f32.mrf.mxu0
    %v323 = vpop.f32.mrf.mxu0
    %v324 = vadd.f32 0.0, %v323
    %v325 = vpop.f32.mrf.mxu0
    %326 = vmatprep.mubr.bf16.mxu0 0
    %327 = vmatmul.mubr.bf16.gmra.mxu0 %v221
    %v328 = vpop.f32.mrf.mxu0
    %v329 = vadd.f32 0.0, %v328
    %v330 = vpop.f32.mrf.mxu0
    %v331 = vpop.f32.mrf.mxu0
    %v332 = vpop.f32.mrf.mxu0
    %333 = vdwg.mxu0
    %v334 = vadd.f32 %v217, %v321
    %v335 = vadd.f32 %v218, %v324
    %v336 = vadd.f32 %v219, %v329
    %337 = vst [vmem:[#allocation2] sm:$0xff] %v334
    %338 = vst [vmem:[#allocation2 + $0x8] sm:$0xff] %v335
    %339 = vst [vmem:[#allocation2 + $0x10] sm:$0xff] %v336
    // Predicated region
    $region38: #{tpu_custom_call.1} parent=1 // pred_check
      %p340 = pneg %p63
    $region39: #{tpu_custom_call.1} parent=1 // pred_check_branch
      %342 = sbr.rel (%p340) target = $region41
    $region40: #{tpu_custom_call.1} parent=1 // pred_region
      %v343 = vld [vmem:[#allocation2] sm:$0xff]
      %v344 = vld [vmem:[#allocation2 + $0x8] sm:$0xff]
      %v345 = vld [vmem:[#allocation2 + $0x10] sm:$0xff]
      %v346 = vld [vmem:[%s4] sm:$0x1]
      %v348 = vlaneseq
      %v349 = vshrl.u32 %v348, 7
      %v350 = vsub.s32 0, %v349
      %v351 = vrot.slane %v346, %v350
      %v353 = vadd.f32 %v343, %v351
      %v354 = vadd.f32 %v344, %v351
      %v355 = vadd.f32 %v345, %v351
      %356 = vst [vmem:[#allocation9] sm:$0xff] %v353
      %357 = vst [vmem:[#allocation9 + $0x8] sm:$0xff] %v354
      %358 = vst [vmem:[#allocation9 + $0x10] sm:$0xff] %v355
    $region41: #{tpu_custom_call.1} parent=1 // pred_fallthru
      _
    // Predicated region
    $region42: #{tpu_custom_call.1} parent=1 // pred_check
      _
    $region43: #{tpu_custom_call.1} parent=1 // pred_check_branch
      %360 = sbr.rel (0) target = $region45
    $region44: #{tpu_custom_call.1} parent=1 // pred_region
      %s362 = ssub.s32 384, 384
      %363 = vsyncadd [#allocation5], %s362
      %s364 = sshll.u32 [#allocation9], 4
      %s365 = int_to_ptr.vmem [resolvable:$true] %s364
      %370 = dma.vmem_to_hbm [thread:$0]  %s365, 384, %s5, [#allocation5], 128, 128, 8
    $region45: #{tpu_custom_call.1} parent=1 // pred_fallthru
      _
    // Predicated region
    $region46: #{tpu_custom_call.1} parent=1 // pred_check
      _
    $region47: #{tpu_custom_call.1} parent=1 // pred_check_branch
      %372 = sbr.rel (0) target = $region49
    $region48: #{tpu_custom_call.1} parent=1 // pred_region
      %373 = dma.done [#allocation5], 384
    $region49: #{tpu_custom_call.1} parent=1 // pred_fallthru
      _
    %374 = vsyncpa [#allocation4], 1
    %375 = vsyncpa [#allocation7], 1
    %376 = vsyncpa [#allocation5], 1

</llo_original>
